<compile_context>
chip_gen: v5e
topology: v5e:2x2
jax: 0.10.0
libtpu: 0.0.40
codegen_flags: <defaults>
</compile_context>

<pallas_src>
import functools

import jax
import jax.numpy as jnp
from jax import lax
from jax.experimental import pallas as pl
from jax.experimental.pallas import tpu as pltpu


def soft_moe_kernel(x_ref, phi_ref, w_ref, b_ref, y_ref, *, num_experts, slots):
    # ---- token L2-normalize (f32 VPU/EUP math, rsqrt instead of sqrt+div) -----
    x = x_ref[0].astype(jnp.float32)                               # [M, D]
    inv_nrm = lax.rsqrt(jnp.maximum(jnp.sum(x * x, axis=-1, keepdims=True), 1e-24))
    xn = x * inv_nrm                                               # F.normalize(x, dim=2)
    xb = xn.astype(jnp.bfloat16)                                   # bf16 MXU operand

    # ---- logits in [NP, M] layout (M on lanes); bf16 MXU, f32 accumulate ------
    # logits[np, m] = sum_d phi[d, np] * xn[m, d]
    logits = lax.dot_general(
        phi_ref[...], xb,
        dimension_numbers=(((1,), (1,)), ((), ())),
        preferred_element_type=jnp.float32)                        # [NP, M]

    # ---- single exp, two normalizations (softmax is shift-invariant) ----------
    g_max = jnp.max(jnp.max(logits, axis=1, keepdims=True), axis=0, keepdims=True)
    e = jnp.exp(logits - g_max)                                    # [NP, M]
    # Dispatch weights: softmax over tokens (torch dim=1) -> axis=1 here.
    disp = e * pl.reciprocal(jnp.sum(e, axis=1, keepdims=True), approx=True)
    # Combine weights: softmax over (experts, slots) (torch dim=(2,3)) -> axis=0.
    comb = e * pl.reciprocal(jnp.sum(e, axis=0, keepdims=True), approx=True)

    # ---- slot inputs: xs[np, d] = sum_m disp[np, m] * xn[m, d] (no transpose) --
    xs = jnp.dot(disp.astype(jnp.bfloat16), xb,
                 preferred_element_type=jnp.float32)               # [NP, D]

    # ---- per-expert Linear (kept per-expert), bias added once ------------------
    ys_parts = []
    for n in range(num_experts):
        xs_n = xs[n * slots:(n + 1) * slots, :].astype(jnp.bfloat16)      # [P, D]
        ys_parts.append(jnp.dot(xs_n, w_ref[n],
                                preferred_element_type=jnp.float32))      # [P, D]
    ys = jnp.concatenate(ys_parts, axis=0) + b_ref[...]            # [NP, D] f32

    # ---- fused combine: one [M, NP] x [NP, D] MXU pass -------------------------
    # y[m, d] = sum_np comb[np, m] * ys[np, d]
    y = lax.dot_general(
        comb.astype(jnp.bfloat16), ys.astype(jnp.bfloat16),
        dimension_numbers=(((0,), (0,)), ((), ())),
        preferred_element_type=jnp.float32)                        # [M, D]
    y_ref[0] = y.astype(y_ref.dtype)


def soft_moe_forward(x, phi, scale, w, bias, *, num_experts, slots):
    B, M, D = x.shape
    NP = num_experts * slots

    # Parameter-side glue (pure JAX, f32): phi <- scale * F.normalize(phi, dim=0),
    # flattened and transposed to [NP, D] so the kernel's logits are lane-dense,
    # then cast to bf16 as an MXU operand.
    phi32 = phi.astype(jnp.float32)
    phi_nrm = jnp.sqrt(jnp.sum(phi32 * phi32, axis=0, keepdims=True))
    phi_t = (scale.astype(jnp.float32) * (phi32 / jnp.maximum(phi_nrm, 1e-12)))
    phi_t = phi_t.reshape(D, NP).T.astype(jnp.bfloat16)            # [NP, D]

    # Expert weights fed to the MXU in bf16; bias pre-expanded to [NP, D] (f32),
    # so the kernel never re-broadcasts it.
    w_b = w.astype(jnp.bfloat16)
    bias_full = jnp.broadcast_to(
        bias.astype(jnp.float32)[:, None, :], (num_experts, slots, D)
    ).reshape(NP, D)

    kernel = functools.partial(soft_moe_kernel, num_experts=num_experts, slots=slots)
    return pl.pallas_call(
        kernel,
        out_shape=jax.ShapeDtypeStruct((B, M, D), x.dtype),
        grid_spec=pltpu.PrefetchScalarGridSpec(
            num_scalar_prefetch=0,
            grid=(B,),
            in_specs=[
                pl.BlockSpec((1, M, D), lambda i: (i, 0, 0)),
                pl.BlockSpec((NP, D), lambda i: (0, 0)),
                pl.BlockSpec((num_experts, D, D), lambda i: (0, 0, 0)),
                pl.BlockSpec((NP, D), lambda i: (0, 0)),
            ],
            out_specs=pl.BlockSpec((1, M, D), lambda i: (i, 0, 0)),
        ),
        # TODO(synk): at production sizes (large D/N) raise vmem_limit_bytes and
        # stream / single-buffer the expert bank W for v7x's 64 MiB VMEM instead
        # of keeping it fully resident; at these test sizes defaults are ample.
        compiler_params=pltpu.CompilerParams(dimension_semantics=("parallel",)),
    )(x, phi_t, w_b, bias_full)


def soft_moe_reference(x, phi, scale, w, bias, *, num_experts, slots):
    """Pure-JAX (f32) mirror of the PyTorch forward (inference path)."""
    xn = x / jnp.maximum(jnp.linalg.norm(x, axis=2, keepdims=True), 1e-12)
    phin = scale * (phi / jnp.maximum(jnp.linalg.norm(phi, axis=0, keepdims=True), 1e-12))
    logits = jnp.einsum('bmd,dnp->bmnp', xn, phin)
    dmax = jnp.max(logits, axis=1, keepdims=True)
    de = jnp.exp(logits - dmax)
    d = de / jnp.sum(de, axis=1, keepdims=True)
    cmax = jnp.max(logits, axis=(2, 3), keepdims=True)
    ce = jnp.exp(logits - cmax)
    c = ce / jnp.sum(ce, axis=(2, 3), keepdims=True)
    xs = jnp.einsum('bmd,bmnp->bnpd', xn, d)
    ys = jnp.stack(
        [jnp.einsum('bpd,de->bpe', xs[:, i], w[i]) + bias[i] for i in range(num_experts)],
        axis=1)
    return jnp.einsum('bnpd,bmnp->bmd', ys, c)


if __name__ == "__main__":
    B, M, D = 2, 16, 128          # batch, seq_len, dim
    N, P = 4, 2                   # num_experts, slots_per_expert

    key = jax.random.PRNGKey(0)
    kx, kphi, kw, kb = jax.random.split(key, 4)

    x = jax.random.normal(kx, (B, M, D), jnp.float32)
    # nn.init.normal_(phi, mean=0, std=1/sqrt(dim))
    phi = jax.random.normal(kphi, (D, N, P), jnp.float32) / (D ** 0.5)
    scale = jnp.ones((1,), jnp.float32)                       # self.scale
    # Expert Linear(D, D) params (weights stored already transposed: x @ W + b).
    w = jax.random.normal(kw, (N, D, D), jnp.float32) / (D ** 0.5)
    bias = 0.1 * jax.random.normal(kb, (N, D), jnp.float32)

    y = soft_moe_forward(x, phi, scale, w, bias, num_experts=N, slots=P)
    y = jax.block_until_ready(y)

    y_ref = soft_moe_reference(x, phi, scale, w, bias, num_experts=N, slots=P)
    assert y.shape == (B, M, D)
    # bf16 MXU operands + approx reciprocal -> slightly looser tolerance than f32.
    assert jnp.allclose(y, y_ref, rtol=2e-2, atol=2e-2), "mismatch vs reference"

    print("KERNEL_OK")
</pallas_src>

<mosaic_0001>
module attributes {stable_mosaic.version = 11 : i64} {
  func.func @soft_moe_kernel(%arg0: i32, %arg1: memref<1x16x128xf32, #tpu.memory_space<vmem>>, %arg2: memref<8x128xbf16, #tpu.memory_space<vmem>>, %arg3: memref<4x128x128xbf16, #tpu.memory_space<vmem>>, %arg4: memref<8x128xf32, #tpu.memory_space<vmem>>, %arg5: memref<1x16x128xf32, #tpu.memory_space<vmem>>) attributes {dimension_semantics = [#tpu.dimension_semantics<parallel>], iteration_bounds = array<i64: 2>, scalar_prefetch = 0 : i64, scratch_operands = 0 : i64, tpu.core_type = #tpu.core_type<tc>, window_params = [{transform_indices = @transform_0, window_bounds = array<i64: 1, 16, 128>}, {pipeline_mode = #tpu.pipeline_mode<synchronous>, transform_indices = @transform_1, window_bounds = array<i64: 8, 128>}, {pipeline_mode = #tpu.pipeline_mode<synchronous>, transform_indices = @transform_2, window_bounds = array<i64: 4, 128, 128>}, {pipeline_mode = #tpu.pipeline_mode<synchronous>, transform_indices = @transform_3, window_bounds = array<i64: 8, 128>}, {transform_indices = @transform_4, window_bounds = array<i64: 1, 16, 128>}]} {
    %c0 = arith.constant 0 : index
    %c0_0 = arith.constant 0 : index
    %c0_1 = arith.constant 0 : index
    %0 = vector.load %arg1[%c0, %c0_0, %c0_1] : memref<1x16x128xf32, #tpu.memory_space<vmem>>, vector<1x16x128xf32>
    %1 = vector.shape_cast %0 : vector<1x16x128xf32> to vector<16x128xf32>
    %2 = arith.mulf %1, %1 : vector<16x128xf32>
    %cst = arith.constant dense<0.000000e+00> : vector<16xf32>
    %3 = vector.multi_reduction <add>, %2, %cst [1] : vector<16x128xf32> to vector<16xf32>
    %4 = vector.shape_cast %3 : vector<16xf32> to vector<16x1xf32>
    %cst_2 = arith.constant 1.000000e-24 : f32
    %5 = vector.broadcast %cst_2 : f32 to vector<16x1xf32>
    %6 = arith.maximumf %4, %5 : vector<16x1xf32>
    %7 = math.rsqrt %6 : vector<16x1xf32>
    %8 = vector.broadcast %7 : vector<16x1xf32> to vector<16x128xf32>
    %9 = arith.mulf %1, %8 : vector<16x128xf32>
    %10 = arith.truncf %9 : vector<16x128xf32> to vector<16x128xbf16>
    %c0_3 = arith.constant 0 : index
    %c0_4 = arith.constant 0 : index
    %11 = vector.load %arg2[%c0_3, %c0_4] : memref<8x128xbf16, #tpu.memory_space<vmem>>, vector<8x128xbf16>
    %cst_5 = arith.constant dense<0.000000e+00> : vector<8x16xf32>
    %12 = tpu.matmul %11, %10, %cst_5 {dimension_numbers = #tpu.dot_dimension_numbers<[1], [1], [0], [0], [0, 0, 1, 0], [], []>} : vector<8x128xbf16>, vector<16x128xbf16>, vector<8x16xf32> -> vector<8x16xf32>
    %cst_6 = arith.constant dense<0xFF800000> : vector<8xf32>
    %13 = vector.multi_reduction <maximumf>, %12, %cst_6 [1] : vector<8x16xf32> to vector<8xf32>
    %14 = vector.shape_cast %13 : vector<8xf32> to vector<8x1xf32>
    %cst_7 = arith.constant dense<0xFF800000> : vector<1xf32>
    %15 = vector.multi_reduction <maximumf>, %14, %cst_7 [0] : vector<8x1xf32> to vector<1xf32>
    %16 = vector.shape_cast %15 : vector<1xf32> to vector<1x1xf32>
    %17 = vector.broadcast %16 : vector<1x1xf32> to vector<8x16xf32>
    %18 = arith.subf %12, %17 : vector<8x16xf32>
    %19 = math.exp %18 : vector<8x16xf32>
    %cst_8 = arith.constant dense<0.000000e+00> : vector<8xf32>
    %20 = vector.multi_reduction <add>, %19, %cst_8 [1] : vector<8x16xf32> to vector<8xf32>
    %21 = vector.shape_cast %20 : vector<8xf32> to vector<8x1xf32>
    %22 = tpu.reciprocal %21 {approx = true} : vector<8x1xf32> -> vector<8x1xf32>
    %23 = vector.broadcast %22 : vector<8x1xf32> to vector<8x16xf32>
    %24 = arith.mulf %19, %23 : vector<8x16xf32>
    %cst_9 = arith.constant dense<0.000000e+00> : vector<16xf32>
    %25 = vector.multi_reduction <add>, %19, %cst_9 [0] : vector<8x16xf32> to vector<16xf32>
    %26 = vector.shape_cast %25 : vector<16xf32> to vector<1x16xf32>
    %27 = tpu.reciprocal %26 {approx = true} : vector<1x16xf32> -> vector<1x16xf32>
    %28 = vector.broadcast %27 : vector<1x16xf32> to vector<8x16xf32>
    %29 = arith.mulf %19, %28 : vector<8x16xf32>
    %30 = arith.truncf %24 : vector<8x16xf32> to vector<8x16xbf16>
    %cst_10 = arith.constant dense<0.000000e+00> : vector<8x128xf32>
    %31 = tpu.matmul %30, %10, %cst_10 {dimension_numbers = #tpu.dot_dimension_numbers<[1], [0], [0], [1], [0, 0, 1, 1], [], []>} : vector<8x16xbf16>, vector<16x128xbf16>, vector<8x128xf32> -> vector<8x128xf32>
    %32 = vector.extract_strided_slice %31 {offsets = [0, 0], sizes = [2, 128], strides = [1, 1]} : vector<8x128xf32> to vector<2x128xf32>
    %33 = arith.truncf %32 : vector<2x128xf32> to vector<2x128xbf16>
    %c0_11 = arith.constant 0 : index
    %c0_12 = arith.constant 0 : index
    %c0_13 = arith.constant 0 : index
    %34 = vector.load %arg3[%c0_11, %c0_12, %c0_13] : memref<4x128x128xbf16, #tpu.memory_space<vmem>>, vector<1x128x128xbf16>
    %35 = vector.shape_cast %34 : vector<1x128x128xbf16> to vector<128x128xbf16>
    %cst_14 = arith.constant dense<0.000000e+00> : vector<2x128xf32>
    %36 = tpu.matmul %33, %35, %cst_14 {dimension_numbers = #tpu.dot_dimension_numbers<[1], [0], [0], [1], [0, 0, 1, 1], [], []>} : vector<2x128xbf16>, vector<128x128xbf16>, vector<2x128xf32> -> vector<2x128xf32>
    %37 = vector.extract_strided_slice %31 {offsets = [2, 0], sizes = [2, 128], strides = [1, 1]} : vector<8x128xf32> to vector<2x128xf32>
    %38 = arith.truncf %37 : vector<2x128xf32> to vector<2x128xbf16>
    %c1 = arith.constant 1 : index
    %c0_15 = arith.constant 0 : index
    %c0_16 = arith.constant 0 : index
    %39 = vector.load %arg3[%c1, %c0_15, %c0_16] : memref<4x128x128xbf16, #tpu.memory_space<vmem>>, vector<1x128x128xbf16>
    %40 = vector.shape_cast %39 : vector<1x128x128xbf16> to vector<128x128xbf16>
    %cst_17 = arith.constant dense<0.000000e+00> : vector<2x128xf32>
    %41 = tpu.matmul %38, %40, %cst_17 {dimension_numbers = #tpu.dot_dimension_numbers<[1], [0], [0], [1], [0, 0, 1, 1], [], []>} : vector<2x128xbf16>, vector<128x128xbf16>, vector<2x128xf32> -> vector<2x128xf32>
    %42 = vector.extract_strided_slice %31 {offsets = [4, 0], sizes = [2, 128], strides = [1, 1]} : vector<8x128xf32> to vector<2x128xf32>
    %43 = arith.truncf %42 : vector<2x128xf32> to vector<2x128xbf16>
    %c2 = arith.constant 2 : index
    %c0_18 = arith.constant 0 : index
    %c0_19 = arith.constant 0 : index
    %44 = vector.load %arg3[%c2, %c0_18, %c0_19] : memref<4x128x128xbf16, #tpu.memory_space<vmem>>, vector<1x128x128xbf16>
    %45 = vector.shape_cast %44 : vector<1x128x128xbf16> to vector<128x128xbf16>
    %cst_20 = arith.constant dense<0.000000e+00> : vector<2x128xf32>
    %46 = tpu.matmul %43, %45, %cst_20 {dimension_numbers = #tpu.dot_dimension_numbers<[1], [0], [0], [1], [0, 0, 1, 1], [], []>} : vector<2x128xbf16>, vector<128x128xbf16>, vector<2x128xf32> -> vector<2x128xf32>
    %47 = vector.extract_strided_slice %31 {offsets = [6, 0], sizes = [2, 128], strides = [1, 1]} : vector<8x128xf32> to vector<2x128xf32>
    %48 = arith.truncf %47 : vector<2x128xf32> to vector<2x128xbf16>
    %c3 = arith.constant 3 : index
    %c0_21 = arith.constant 0 : index
    %c0_22 = arith.constant 0 : index
    %49 = vector.load %arg3[%c3, %c0_21, %c0_22] : memref<4x128x128xbf16, #tpu.memory_space<vmem>>, vector<1x128x128xbf16>
    %50 = vector.shape_cast %49 : vector<1x128x128xbf16> to vector<128x128xbf16>
    %cst_23 = arith.constant dense<0.000000e+00> : vector<2x128xf32>
    %51 = tpu.matmul %48, %50, %cst_23 {dimension_numbers = #tpu.dot_dimension_numbers<[1], [0], [0], [1], [0, 0, 1, 1], [], []>} : vector<2x128xbf16>, vector<128x128xbf16>, vector<2x128xf32> -> vector<2x128xf32>
    %52 = tpu.concatenate %36, %41, %46, %51 in 0 : vector<2x128xf32>, vector<2x128xf32>, vector<2x128xf32>, vector<2x128xf32> -> vector<8x128xf32>
    %c0_24 = arith.constant 0 : index
    %c0_25 = arith.constant 0 : index
    %53 = vector.load %arg4[%c0_24, %c0_25] : memref<8x128xf32, #tpu.memory_space<vmem>>, vector<8x128xf32>
    %54 = arith.addf %52, %53 : vector<8x128xf32>
    %55 = arith.truncf %29 : vector<8x16xf32> to vector<8x16xbf16>
    %56 = arith.truncf %54 : vector<8x128xf32> to vector<8x128xbf16>
    %cst_26 = arith.constant dense<0.000000e+00> : vector<16x128xf32>
    %57 = tpu.matmul %55, %56, %cst_26 {dimension_numbers = #tpu.dot_dimension_numbers<[0], [0], [1], [1], [0, 1, 1, 1], [], []>} : vector<8x16xbf16>, vector<8x128xbf16>, vector<16x128xf32> -> vector<16x128xf32>
    %c0_27 = arith.constant 0 : index
    %c0_28 = arith.constant 0 : index
    %c0_29 = arith.constant 0 : index
    %58 = vector.load %arg5[%c0_27, %c0_28, %c0_29] : memref<1x16x128xf32, #tpu.memory_space<vmem>>, vector<1x16x128xf32>
    %59 = vector.shape_cast %58 : vector<1x16x128xf32> to vector<16x128xf32>
    %60 = vector.shape_cast %57 : vector<16x128xf32> to vector<1x16x128xf32>
    tpu.vector_store %arg5[%c0_27, %c0_28, %c0_29], %60 {strides = array<i32>} : memref<1x16x128xf32, #tpu.memory_space<vmem>>, vector<1x16x128xf32>,
    return
  }
  func.func @transform_0(%arg0: i32) -> (i32, i32, i32) {
    %c0_i32 = arith.constant 0 : i32
    %c0_i32_0 = arith.constant 0 : i32
    %c0_i32_1 = arith.constant 0 : i32
    return %arg0, %c0_i32, %c0_i32_0 : i32, i32, i32
  }
  func.func @transform_1(%arg0: i32) -> (i32, i32) {
    %c0_i32 = arith.constant 0 : i32
    %c0_i32_0 = arith.constant 0 : i32
    %c0_i32_1 = arith.constant 0 : i32
    return %c0_i32, %c0_i32_0 : i32, i32
  }
  func.func @transform_2(%arg0: i32) -> (i32, i32, i32) {
    %c0_i32 = arith.constant 0 : i32
    %c0_i32_0 = arith.constant 0 : i32
    %c0_i32_1 = arith.constant 0 : i32
    %c0_i32_2 = arith.constant 0 : i32
    return %c0_i32, %c0_i32_0, %c0_i32_1 : i32, i32, i32
  }
  func.func @transform_3(%arg0: i32) -> (i32, i32) {
    %c0_i32 = arith.constant 0 : i32
    %c0_i32_0 = arith.constant 0 : i32
    %c0_i32_1 = arith.constant 0 : i32
    return %c0_i32, %c0_i32_0 : i32, i32
  }
  func.func @transform_4(%arg0: i32) -> (i32, i32, i32) {
    %c0_i32 = arith.constant 0 : i32
    %c0_i32_0 = arith.constant 0 : i32
    %c0_i32_1 = arith.constant 0 : i32
    return %arg0, %c0_i32, %c0_i32_0 : i32, i32, i32
  }
}

</mosaic_0001>

<llo_original>
// kernel: tpu_custom_call.1
$region0: #{tpu_custom_call.1}
  #allocation0 [shape = 'u32[]', space=smem, size = 0x4, offset = 0x4, fixed_abs, tag = 'smem constant byte address 0x4 - core index']
  #allocation1 [shape = 'u32[72,128]{1,0:T(1,128)}', space=vmem, size = 0x9000, scoped, tag = 'internal scratch']
  %s0 = inlined_call_operand.hbm [shape: f32[2,16,128], index: 0, kind: input, shape index: {}]
  %s1 = inlined_call_operand.hbm [shape: bf16[8,128], index: 1, kind: input, shape index: {}]
  %s2 = inlined_call_operand.hbm [shape: bf16[4,128,128], index: 2, kind: input, shape index: {}]
  %s3 = inlined_call_operand.hbm [shape: f32[8,128], index: 3, kind: input, shape index: {}]
  %s4 = inlined_call_operand.hbm [shape: f32[2,16,128], index: 4, kind: output, shape index: {}]
  %s5 = sld [smem:[#allocation0]]
  $region65: #{tpu_custom_call.1} parent=0
    _
  %s7 = ssub.s32 1, %s5
  %s8 = scalar_select 0, %s7, %s5
  $region1: #{tpu_custom_call.1} parent=0
    #allocation2 [shape = 'u8[16384]{0}', space=vmem, size = 0x4000, scoped, tag = 'input window, operand 0']
    #allocation3 [shape = 's32[2]{0}', space=sflag, size = 0x8, scoped, tag = 'scoped memory for tpu_custom_call.1']
    #allocation4 [shape = 's32[2]{0}', space=sflag, size = 0x8, scoped, tag = 'scoped memory for tpu_custom_call.1']
    #allocation5 [shape = 'u8[2048]{0}', space=vmem, size = 0x800, scoped, tag = 'input window, operand 1, single buffered']
    #allocation6 [shape = 's32[1]{0}', space=sflag, size = 0x4, scoped, tag = 'scoped memory for tpu_custom_call.1']
    #allocation7 [shape = 'u8[131072]{0}', space=vmem, size = 0x20000, scoped, tag = 'input window, operand 2, single buffered']
    #allocation8 [shape = 'u8[4096]{0}', space=vmem, size = 0x1000, scoped, tag = 'input window, operand 3, single buffered']
    #allocation9 [shape = 's32[1]{0}', space=sflag, size = 0x4, scoped, tag = 'scoped memory for tpu_custom_call.1']
    #allocation10 [shape = 'u8[16384]{0}', space=vmem, size = 0x4000, scoped, tag = 'output window, operand 0']
    %9 = vsyncpa [#allocation3], 0
    %s10 = scalar_lea.sflag [#allocation3], 1
    %11 = vsyncpa %s10, 0
    %12 = vsyncpa [#allocation6], 0
    %13 = vsyncpa [#allocation9], 0
    %14 = vsyncpa [#allocation4], 0
    %s15 = scalar_lea.sflag [#allocation4], 1
    %16 = vsyncpa %s15, 0
    loop: start=0, step=1, limit=4
    $region2: #{tpu_custom_call.1} parent=1 // loop_pre_header
      _
    $region3: #{tpu_custom_call.1} parent=1 // loop_header
      %s18 = sphi 0, %s22
      %p19 = scmp.ge.s32.totalorder %s18, 4
      %s28 = sphi 0, %s30
      %s31 = sphi 0, %s28
      %s32 = sphi 0, %s31
      %s48 = sphi 0, %s32
      %s52 = sphi 0, %s52
      %s54 = sphi 0, %s52
      %s55 = sphi 0, %s54
      %s69 = sphi 0, %s55
      %s73 = sphi 0, %s73
      %s75 = sphi 0, %s73
      %s76 = sphi 0, %s75
      %s90 = sphi 0, %s76
      %s94 = sphi 0, %s94
      %s96 = sphi 0, %s94
      %s97 = sphi 0, %s96
      %s111 = sphi 0, %s97
      %s117 = sphi 0, %s119
      %s120 = sphi 0, %s117
      %s121 = sphi 0, %s120
      %s137 = sphi 0, %s121
    $region4: #{tpu_custom_call.1} parent=1 // loop_header_branch
      %21 = sbr.rel (%p19) target = $region8
    $region5: #{tpu_custom_call.1} parent=1 // loop_body
      %s23 = ssub.s32 %s18, 1
      %s24 = ssub.s32 %s18, 2
      %s25 = sadd.s32 %s18, 1
      %s26 = ssub.s32 %s18, %s25
      %p27 = scmp.eq.s32.totalorder %s26, 0
      %s29 = sadd.s32 %s28, 1
      %s30 = scalar_select %p27, %s28, %s29
      %p33 = pneg %p27
      %p34 = scmp.eq.s32.totalorder %s18, 1
      %p35 = por %p33, %p34
      %p36 = scmp.ne.s32.totalorder %s28, %s31
      %p37 = scmp.eq.s32.totalorder %s18, 0
      %p38 = por %p36, %p37
      %p39 = scmp.ne.s32.totalorder %s28, %s31
      %p40 = scmp.eq.s32.totalorder %s23, 1
      %p41 = por %p39, %p40
      %p42 = scmp.ne.s32.totalorder %s31, %s32
      %p43 = scmp.eq.s32.totalorder %s23, 0
      %p44 = por %p42, %p43
      %p45 = scmp.ne.s32.totalorder %s31, %s32
      %p46 = scmp.eq.s32.totalorder %s24, 1
      %p47 = por %p45, %p46
      %p49 = scmp.ne.s32.totalorder %s32, %s48
      %p50 = scmp.eq.s32.totalorder %s24, 0
      %p51 = por %p49, %p50
      %s53 = sadd.s32 %s52, 1
      %p56 = scmp.eq.s32.totalorder %s18, 1
      %p57 = scmp.ne.s32.totalorder %s52, %s54
      %p58 = scmp.eq.s32.totalorder %s18, 0
      %p59 = por %p57, %p58
      %p60 = scmp.ne.s32.totalorder %s52, %s54
      %p61 = scmp.eq.s32.totalorder %s23, 1
      %p62 = por %p60, %p61
      %p63 = scmp.ne.s32.totalorder %s54, %s55
      %p64 = scmp.eq.s32.totalorder %s23, 0
      %p65 = por %p63, %p64
      %p66 = scmp.ne.s32.totalorder %s54, %s55
      %p67 = scmp.eq.s32.totalorder %s24, 1
      %p68 = por %p66, %p67
      %p70 = scmp.ne.s32.totalorder %s55, %s69
      %p71 = scmp.eq.s32.totalorder %s24, 0
      %p72 = por %p70, %p71
      %s74 = sadd.s32 %s73, 1
      %p77 = scmp.eq.s32.totalorder %s18, 1
      %p78 = scmp.ne.s32.totalorder %s73, %s75
      %p79 = scmp.eq.s32.totalorder %s18, 0
      %p80 = por %p78, %p79
      %p81 = scmp.ne.s32.totalorder %s73, %s75
      %p82 = scmp.eq.s32.totalorder %s23, 1
      %p83 = por %p81, %p82
      %p84 = scmp.ne.s32.totalorder %s75, %s76
      %p85 = scmp.eq.s32.totalorder %s23, 0
      %p86 = por %p84, %p85
      %p87 = scmp.ne.s32.totalorder %s75, %s76
      %p88 = scmp.eq.s32.totalorder %s24, 1
      %p89 = por %p87, %p88
      %p91 = scmp.ne.s32.totalorder %s76, %s90
      %p92 = scmp.eq.s32.totalorder %s24, 0
      %p93 = por %p91, %p92
      %s95 = sadd.s32 %s94, 1
      %p98 = scmp.eq.s32.totalorder %s18, 1
      %p99 = scmp.ne.s32.totalorder %s94, %s96
      %p100 = scmp.eq.s32.totalorder %s18, 0
      %p101 = por %p99, %p100
      %p102 = scmp.ne.s32.totalorder %s94, %s96
      %p103 = scmp.eq.s32.totalorder %s23, 1
      %p104 = por %p102, %p103
      %p105 = scmp.ne.s32.totalorder %s96, %s97
      %p106 = scmp.eq.s32.totalorder %s23, 0
      %p107 = por %p105, %p106
      %p108 = scmp.ne.s32.totalorder %s96, %s97
      %p109 = scmp.eq.s32.totalorder %s24, 1
      %p110 = por %p108, %p109
      %p112 = scmp.ne.s32.totalorder %s97, %s111
      %p113 = scmp.eq.s32.totalorder %s24, 0
      %p114 = por %p112, %p113
      %s115 = ssub.s32 %s18, %s25
      %p116 = scmp.eq.s32.totalorder %s115, 0
      %s118 = sadd.s32 %s117, 1
      %s119 = scalar_select %p116, %s117, %s118
      %p122 = pneg %p116
      %p123 = scmp.eq.s32.totalorder %s18, 1
      %p124 = por %p122, %p123
      %p125 = scmp.ne.s32.totalorder %s117, %s120
      %p126 = scmp.eq.s32.totalorder %s18, 0
      %p127 = por %p125, %p126
      %p128 = scmp.ne.s32.totalorder %s117, %s120
      %p129 = scmp.eq.s32.totalorder %s23, 1
      %p130 = por %p128, %p129
      %p131 = scmp.ne.s32.totalorder %s120, %s121
      %p132 = scmp.eq.s32.totalorder %s23, 0
      %p133 = por %p131, %p132
      %p134 = scmp.ne.s32.totalorder %s120, %s121
      %p135 = scmp.eq.s32.totalorder %s24, 1
      %p136 = por %p134, %p135
      %p138 = scmp.ne.s32.totalorder %s121, %s137
      %p139 = scmp.eq.s32.totalorder %s24, 0
      %p140 = por %p138, %p139
      %p141 = scmp.le.s32.totalorder 1, %s18
      %p142 = scmp.lt.s32.totalorder %s18, 3
      %p143 = pnand %p141, %p142
      %p144 = pneg %p143
      // Predicated region
      $region9: #{tpu_custom_call.1} parent=5 // pred_check
        _
      $region10: #{tpu_custom_call.1} parent=5 // pred_check_branch
        %146 = sbr.rel (%p143) target = $region12
      $region11: #{tpu_custom_call.1} parent=5 // pred_region
        %s147 = ssub.s32 %s18, 1
        // Predicated region
        $region13: #{tpu_custom_call.1} parent=11 // pred_check
          %p148 = pneg %p65
        $region14: #{tpu_custom_call.1} parent=11 // pred_check_branch
          %150 = sbr.rel (%p148) target = $region16
        $region15: #{tpu_custom_call.1} parent=11 // pred_region
          %152 = vsyncadd [#allocation6], 0
          %s154 = sshll.u32 %s1, 4
          %s155 = int_to_ptr.hbm [resolvable:$true] %s154
          %s156 = sshll.u32 [#allocation5], 4
          %s157 = int_to_ptr.vmem [resolvable:$true] %s156
          %159 = dma.hbm_to_vmem [thread:$0]  %s155, 64, %s157, [#allocation6]
        $region16: #{tpu_custom_call.1} parent=11 // pred_fallthru
          _
        // Predicated region
        $region17: #{tpu_custom_call.1} parent=11 // pred_check
          %p160 = pneg %p86
        $region18: #{tpu_custom_call.1} parent=11 // pred_check_branch
          %162 = sbr.rel (%p160) target = $region20
        $region19: #{tpu_custom_call.1} parent=11 // pred_region
          %164 = vsyncadd [#allocation6], 0
          %s165 = sshll.u32 %s2, 4
          %s166 = int_to_ptr.hbm [resolvable:$true] %s165
          %s167 = sshll.u32 [#allocation7], 4
          %s168 = int_to_ptr.vmem [resolvable:$true] %s167
          %173 = dma.hbm_to_vmem [thread:$0]  %s166, 4096, %s168, [#allocation6], 64, 64, 4
        $region20: #{tpu_custom_call.1} parent=11 // pred_fallthru
          _
        // Predicated region
        $region21: #{tpu_custom_call.1} parent=11 // pred_check
          %p174 = pneg %p107
        $region22: #{tpu_custom_call.1} parent=11 // pred_check_branch
          %176 = sbr.rel (%p174) target = $region24
        $region23: #{tpu_custom_call.1} parent=11 // pred_region
          %178 = vsyncadd [#allocation9], 0
          %s180 = sshll.u32 %s3, 4
          %s181 = int_to_ptr.hbm [resolvable:$true] %s180
          %s182 = sshll.u32 [#allocation8], 4
          %s183 = int_to_ptr.vmem [resolvable:$true] %s182
          %185 = dma.hbm_to_vmem [thread:$0]  %s181, 128, %s183, [#allocation9]
        $region24: #{tpu_custom_call.1} parent=11 // pred_fallthru
          _
      $region12: #{tpu_custom_call.1} parent=5 // pred_fallthru
        _
      %p186 = scmp.lt.s32.totalorder %s18, 2
      // Predicated region
      $region25: #{tpu_custom_call.1} parent=5 // pred_check
        %p187 = pneg %p186
      $region26: #{tpu_custom_call.1} parent=5 // pred_check_branch
        %189 = sbr.rel (%p187) target = $region28
      $region27: #{tpu_custom_call.1} parent=5 // pred_region
        // Predicated region
        $region29: #{tpu_custom_call.1} parent=27 // pred_check
          %p190 = pneg %p38
        $region30: #{tpu_custom_call.1} parent=27 // pred_check_branch
          %192 = sbr.rel (%p190) target = $region32
        $region31: #{tpu_custom_call.1} parent=27 // pred_region
          %s193 = sand.u32 %s28, 1
          %s194 = scalar_lea.sflag [#allocation3], %s193
          %s195 = sand.u32 %s28, 1
          %s196 = smul.addr %s195, 16
          %s197 = scalar_lea.vmem [#allocation2], %s196
          %199 = vsyncadd %s194, 0
          %s200 = smul.addr %s18, 2
          %s201 = smul.addr %s200, 8
          %s202 = scalar_lea.hbm %s0, %s201
          %s203 = sshll.u32 %s202, 4
          %s204 = int_to_ptr.hbm [resolvable:$true] %s203
          %s205 = sshll.u32 %s197, 4
          %s206 = int_to_ptr.vmem [resolvable:$true] %s205
          %211 = dma.hbm_to_vmem [thread:$0]  %s204, 256, %s206, %s194, 128, 128, 8
        $region32: #{tpu_custom_call.1} parent=27 // pred_fallthru
          _
      $region28: #{tpu_custom_call.1} parent=5 // pred_fallthru
        _
      %p212 = scmp.le.s32.totalorder 1, %s18
      %p213 = scmp.lt.s32.totalorder %s18, 3
      %p214 = pnand %p212, %p213
      %p215 = pneg %p214
      // Predicated region
      $region33: #{tpu_custom_call.1} parent=5 // pred_check
        _
      $region34: #{tpu_custom_call.1} parent=5 // pred_check_branch
        %217 = sbr.rel (%p214) target = $region36
      $region35: #{tpu_custom_call.1} parent=5 // pred_region
        %s218 = ssub.s32 %s18, 1
        %s219 = sand.u32 %s31, 1
        %s220 = scalar_lea.sflag [#allocation3], %s219
        %s221 = sand.u32 %s31, 1
        %s222 = smul.addr %s221, 16
        %s223 = scalar_lea.vmem [#allocation2], %s222
        // Predicated region
        $region37: #{tpu_custom_call.1} parent=35 // pred_check
          %p224 = pneg %p44
        $region38: #{tpu_custom_call.1} parent=35 // pred_check_branch
          %226 = sbr.rel (%p224) target = $region40
        $region39: #{tpu_custom_call.1} parent=35 // pred_region
          %228 = dma.done %s220, 256
        $region40: #{tpu_custom_call.1} parent=35 // pred_fallthru
          _
        // Predicated region
        $region41: #{tpu_custom_call.1} parent=35 // pred_check
          %p229 = pneg %p65
        $region42: #{tpu_custom_call.1} parent=35 // pred_check_branch
          %231 = sbr.rel (%p229) target = $region44
        $region43: #{tpu_custom_call.1} parent=35 // pred_region
          %233 = dma.done [#allocation6], 64
        $region44: #{tpu_custom_call.1} parent=35 // pred_fallthru
          _
        // Predicated region
        $region45: #{tpu_custom_call.1} parent=35 // pred_check
          %p234 = pneg %p86
        $region46: #{tpu_custom_call.1} parent=35 // pred_check_branch
          %236 = sbr.rel (%p234) target = $region48
        $region47: #{tpu_custom_call.1} parent=35 // pred_region
          %238 = dma.done [#allocation6], 4096
        $region48: #{tpu_custom_call.1} parent=35 // pred_fallthru
          _
        // Predicated region
        $region49: #{tpu_custom_call.1} parent=35 // pred_check
          %p239 = pneg %p107
        $region50: #{tpu_custom_call.1} parent=35 // pred_check_branch
          %241 = sbr.rel (%p239) target = $region52
        $region51: #{tpu_custom_call.1} parent=35 // pred_region
          %243 = dma.done [#allocation9], 128
        $region52: #{tpu_custom_call.1} parent=35 // pred_fallthru
          _
        %s244 = sand.u32 %s31, 1
        %s245 = scalar_lea.sflag [#allocation3], %s244
        %s246 = sand.u32 %s31, 1
        %s247 = smul.addr %s246, 16
        %s248 = scalar_lea.vmem [#allocation2], %s247
        %p249 = pneg %p44
        %p250 = pneg %p41
        %p251 = pneg %p65
        %p252 = pneg %p62
        %p253 = pneg %p86
        %p254 = pneg %p83
        %p255 = pneg %p107
        %p256 = pneg %p104
        %p257 = pneg %p133
        %p258 = pneg %p130
        %s259 = sand.u32 %s120, 1
        %s260 = scalar_lea.sflag [#allocation4], %s259
        %s261 = sand.u32 %s120, 1
        %s262 = smul.addr %s261, 16
        %s263 = scalar_lea.vmem [#allocation10], %s262
        %v265 = vld [vmem:[%s223] sm:$0xff]
        %v266 = vld [vmem:[%s223 + $0x8] sm:$0xff]
        %v267 = vmul.f32 %v265, %v265
        %v268 = vmul.f32 %v266, %v266
        %269 = vadd.xlane.f32.xlu0 %v267
        %v270 = vpop.xlane.xlu0 %269
        %271 = vadd.xlane.f32.xlu0 %v268
        %v272 = vpop.xlane.xlu0 %271
        %v273 = vmax.f32 %v270, 1e-24
        %v274 = vmax.f32 %v272, 1e-24
        %v275 = vrsqrt.pop %v273
        %v276 = vmul.f32 %v275, %v273
        %v277 = vmul.f32 %v276, %v275
        %v278 = vmul.f32 0.5, %v277
        %v279 = vsub.f32 1.5, %v278
        %v280 = vmul.f32 %v275, %v279
        %vm281 = vweird.f32 %v273
        %vm282 = vweird.f32 %v275
        %vm283 = vmor %vm281, %vm282
        %v284 = vsel %vm283, %v275, %v280
        %v285 = vrsqrt.pop %v274
        %v286 = vmul.f32 %v285, %v274
        %v287 = vmul.f32 %v286, %v285
        %v288 = vmul.f32 0.5, %v287
        %v289 = vsub.f32 1.5, %v288
        %v290 = vmul.f32 %v285, %v289
        %vm291 = vweird.f32 %v274
        %vm292 = vweird.f32 %v285
        %vm293 = vmor %vm291, %vm292
        %v294 = vsel %vm293, %v285, %v290
        %v295 = vmul.f32 %v265, %v284
        %v296 = vmul.f32 %v266, %v294
        %v297 = vpack.c.bf16 %v296, %v295
        %v298 = vld [vmem:[#allocation5] sm:$0xf]
        %299 = vmatpush.bf16.xpose.msra.mxu0 0
        %300 = vmatpush.bf16.xpose.msra.mxu0 0
        %301 = vmatpush.bf16.xpose.msra.mxu0 0
        %302 = vmatpush.bf16.xpose.msra.mxu0 0
        %303 = vmatpush.bf16.xpose.msra.mxu0 0
        %304 = vmatpush.bf16.xpose.msra.mxu0 0
        %305 = vmatpush.bf16.xpose.msra.mxu0 0
        %306 = vmatpush.bf16.xpose.msra.mxu0 %v297
        %307 = vmatmul.bf16.gmra.mxu0 %v298
        %v308 = vpop.f32.mrf.mxu0
        %v309 = vadd.f32 0.0, %v308
        %v310 = vpop.f32.mrf.mxu0
        %311 = vdwg.mxu0
        %vm312 = vcmask 130048
        %v313 = vsel %vm312, %v309, -inf
        %314 = vmax.xlane.f32.xlu0 %v313
        %v315 = vpop.xlane.xlu0 %314
        %v316 = vrot.slane %v315, 4
        %v317 = vmax.f32 %v315, %v316
        %v318 = vrot.slane %v317, 2
        %v319 = vmax.f32 %v317, %v318
        %v320 = vrot.slane %v319, 1
        %v321 = vmax.f32 %v319, %v320
        %v322 = vsub.f32 %v309, %v321
        %v323 = vmul.f32 %v322, 1.442695
        %v324 = vpow.pop %v323
        %v325 = vsel %vm312, %v324, 0.0
        %326 = vadd.xlane.f32.xlu0 %v325
        %v327 = vpop.xlane.xlu0 %326
        %v328 = vrcp.pop %v327
        %v329 = vmul.f32 %v324, %v328
        %v330 = vrot.slane %v325, 4
        %v331 = vadd.f32 %v325, %v330
        %v332 = vrot.slane %v331, 2
        %v333 = vadd.f32 %v331, %v332
        %v334 = vrot.slane %v333, 1
        %v335 = vadd.f32 %v333, %v334
        %v336 = vrcp.pop %v335
        %v337 = vmul.f32 %v324, %v336
        %v338 = vpack.c.bf16 %v329, %v329
        %v340 = vsel %vm312, %v338, 0
        %342 = vmatpush.bf16.msra.mxu0 0
        %343 = vmatpush.bf16.msra.mxu0 0
        %344 = vmatpush.bf16.msra.mxu0 0
        %345 = vmatpush.bf16.msra.mxu0 0
        %346 = vmatpush.bf16.msra.mxu0 0
        %347 = vmatpush.bf16.msra.mxu0 0
        %348 = vmatpush.bf16.msra.mxu0 0
        %349 = vmatpush.bf16.msra.mxu0 %v297
        %350 = vmatmul.bf16.gmra.mxu0 %v340
        %v351 = vpop.f32.mrf.mxu0
        %v352 = vadd.f32 0.0, %v351
        %v353 = vpop.f32.mrf.mxu0
        %354 = vdwg.mxu0
        %v355 = vpack.c.bf16 %v352, %v352
        %v356 = vld [vmem:[#allocation7] sm:$0xf]
        %v357 = vld [vmem:[#allocation7 + $0x4] sm:$0xf]
        %v358 = vld [vmem:[#allocation7 + $0x8] sm:$0xf]
        %v359 = vld [vmem:[#allocation7 + $0xc] sm:$0xf]
        %v360 = vld [vmem:[#allocation7 + $0x10] sm:$0xf]
        %v361 = vld [vmem:[#allocation7 + $0x14] sm:$0xf]
        %v362 = vld [vmem:[#allocation7 + $0x18] sm:$0xf]
        %v363 = vld [vmem:[#allocation7 + $0x1c] sm:$0xf]
        %v364 = vld [vmem:[#allocation7 + $0x20] sm:$0xf]
        %v365 = vld [vmem:[#allocation7 + $0x24] sm:$0xf]
        %v366 = vld [vmem:[#allocation7 + $0x28] sm:$0xf]
        %v367 = vld [vmem:[#allocation7 + $0x2c] sm:$0xf]
        %v368 = vld [vmem:[#allocation7 + $0x30] sm:$0xf]
        %v369 = vld [vmem:[#allocation7 + $0x34] sm:$0xf]
        %v370 = vld [vmem:[#allocation7 + $0x38] sm:$0xf]
        %v371 = vld [vmem:[#allocation7 + $0x3c] sm:$0xf]
        %v388 = vunpack.c.l.b16 %v356
        %v389 = vunpack.c.l.b16 %v357
        %v390 = vunpack.c.l.b16 %v358
        %v391 = vunpack.c.l.b16 %v359
        %v392 = vunpack.c.l.b16 %v360
        %v393 = vunpack.c.l.b16 %v361
        %v394 = vunpack.c.l.b16 %v362
        %v395 = vunpack.c.l.b16 %v363
        %v396 = vunpack.c.l.b16 %v364
        %v397 = vunpack.c.l.b16 %v365
        %v398 = vunpack.c.l.b16 %v366
        %v399 = vunpack.c.l.b16 %v367
        %v400 = vunpack.c.l.b16 %v368
        %v401 = vunpack.c.l.b16 %v369
        %v402 = vunpack.c.l.b16 %v370
        %v403 = vunpack.c.l.b16 %v371
        %v404 = vpack.c.b16 %v389, %v388
        %v405 = vpack.c.b16 %v391, %v390
        %v406 = vpack.c.b16 %v393, %v392
        %v407 = vpack.c.b16 %v395, %v394
        %v408 = vpack.c.b16 %v397, %v396
        %v409 = vpack.c.b16 %v399, %v398
        %v410 = vpack.c.b16 %v401, %v400
        %v411 = vpack.c.b16 %v403, %v402
        %420 = vmatpush.bf16.msra.mxu0 %v411
        %421 = vmatpush.bf16.msra.mxu0 %v410
        %422 = vmatpush.bf16.msra.mxu0 %v409
        %423 = vmatpush.bf16.msra.mxu0 %v408
        %424 = vmatpush.bf16.msra.mxu0 %v407
        %425 = vmatpush.bf16.msra.mxu0 %v406
        %426 = vmatpush.bf16.msra.mxu0 %v405
        %427 = vmatpush.bf16.msra.mxu0 %v404
        %428 = vmatmul.bf16.gmra.mxu0 %v355
        %v429 = vpop.f32.mrf.mxu0
        %v430 = vadd.f32 0.0, %v429
        %v431 = vpop.f32.mrf.mxu0
        %432 = vdwg.mxu0
        %s433 = scalar_lea.vmem [#allocation7], 64
        %v434 = vld [vmem:[%s433] sm:$0xf]
        %v435 = vld [vmem:[%s433 + $0x4] sm:$0xf]
        %v436 = vld [vmem:[%s433 + $0x8] sm:$0xf]
        %v437 = vld [vmem:[%s433 + $0xc] sm:$0xf]
        %v438 = vld [vmem:[%s433 + $0x10] sm:$0xf]
        %v439 = vld [vmem:[%s433 + $0x14] sm:$0xf]
        %v440 = vld [vmem:[%s433 + $0x18] sm:$0xf]
        %v441 = vld [vmem:[%s433 + $0x1c] sm:$0xf]
        %v442 = vld [vmem:[%s433 + $0x20] sm:$0xf]
        %v443 = vld [vmem:[%s433 + $0x24] sm:$0xf]
        %v444 = vld [vmem:[%s433 + $0x28] sm:$0xf]
        %v445 = vld [vmem:[%s433 + $0x2c] sm:$0xf]
        %v446 = vld [vmem:[%s433 + $0x30] sm:$0xf]
        %v447 = vld [vmem:[%s433 + $0x34] sm:$0xf]
        %v448 = vld [vmem:[%s433 + $0x38] sm:$0xf]
        %v449 = vld [vmem:[%s433 + $0x3c] sm:$0xf]
        %v451 = vrot.slane %v355, 1
        %v469 = vunpack.c.l.b16 %v434
        %v470 = vunpack.c.l.b16 %v435
        %v471 = vunpack.c.l.b16 %v436
        %v472 = vunpack.c.l.b16 %v437
        %v473 = vunpack.c.l.b16 %v438
        %v474 = vunpack.c.l.b16 %v439
        %v475 = vunpack.c.l.b16 %v440
        %v476 = vunpack.c.l.b16 %v441
        %v477 = vunpack.c.l.b16 %v442
        %v478 = vunpack.c.l.b16 %v443
        %v479 = vunpack.c.l.b16 %v444
        %v480 = vunpack.c.l.b16 %v445
        %v481 = vunpack.c.l.b16 %v446
        %v482 = vunpack.c.l.b16 %v447
        %v483 = vunpack.c.l.b16 %v448
        %v484 = vunpack.c.l.b16 %v449
        %v485 = vpack.c.b16 %v470, %v469
        %v486 = vpack.c.b16 %v472, %v471
        %v487 = vpack.c.b16 %v474, %v473
        %v488 = vpack.c.b16 %v476, %v475
        %v489 = vpack.c.b16 %v478, %v477
        %v490 = vpack.c.b16 %v480, %v479
        %v491 = vpack.c.b16 %v482, %v481
        %v492 = vpack.c.b16 %v484, %v483
        %501 = vmatpush.bf16.msra.mxu0 %v492
        %502 = vmatpush.bf16.msra.mxu0 %v491
        %503 = vmatpush.bf16.msra.mxu0 %v490
        %504 = vmatpush.bf16.msra.mxu0 %v489
        %505 = vmatpush.bf16.msra.mxu0 %v488
        %506 = vmatpush.bf16.msra.mxu0 %v487
        %507 = vmatpush.bf16.msra.mxu0 %v486
        %508 = vmatpush.bf16.msra.mxu0 %v485
        %509 = vmatmul.bf16.gmra.mxu0 %v451
        %v510 = vpop.f32.mrf.mxu0
        %v511 = vadd.f32 0.0, %v510
        %v512 = vpop.f32.mrf.mxu0
        %513 = vdwg.mxu0
        %s514 = scalar_lea.vmem [#allocation7], 128
        %v515 = vld [vmem:[%s514] sm:$0xf]
        %v516 = vld [vmem:[%s514 + $0x4] sm:$0xf]
        %v517 = vld [vmem:[%s514 + $0x8] sm:$0xf]
        %v518 = vld [vmem:[%s514 + $0xc] sm:$0xf]
        %v519 = vld [vmem:[%s514 + $0x10] sm:$0xf]
        %v520 = vld [vmem:[%s514 + $0x14] sm:$0xf]
        %v521 = vld [vmem:[%s514 + $0x18] sm:$0xf]
        %v522 = vld [vmem:[%s514 + $0x1c] sm:$0xf]
        %v523 = vld [vmem:[%s514 + $0x20] sm:$0xf]
        %v524 = vld [vmem:[%s514 + $0x24] sm:$0xf]
        %v525 = vld [vmem:[%s514 + $0x28] sm:$0xf]
        %v526 = vld [vmem:[%s514 + $0x2c] sm:$0xf]
        %v527 = vld [vmem:[%s514 + $0x30] sm:$0xf]
        %v528 = vld [vmem:[%s514 + $0x34] sm:$0xf]
        %v529 = vld [vmem:[%s514 + $0x38] sm:$0xf]
        %v530 = vld [vmem:[%s514 + $0x3c] sm:$0xf]
        %v531 = vrot.slane %v355, 2
        %v549 = vunpack.c.l.b16 %v515
        %v550 = vunpack.c.l.b16 %v516
        %v551 = vunpack.c.l.b16 %v517
        %v552 = vunpack.c.l.b16 %v518
        %v553 = vunpack.c.l.b16 %v519
        %v554 = vunpack.c.l.b16 %v520
        %v555 = vunpack.c.l.b16 %v521
        %v556 = vunpack.c.l.b16 %v522
        %v557 = vunpack.c.l.b16 %v523
        %v558 = vunpack.c.l.b16 %v524
        %v559 = vunpack.c.l.b16 %v525
        %v560 = vunpack.c.l.b16 %v526
        %v561 = vunpack.c.l.b16 %v527
        %v562 = vunpack.c.l.b16 %v528
        %v563 = vunpack.c.l.b16 %v529
        %v564 = vunpack.c.l.b16 %v530
        %v565 = vpack.c.b16 %v550, %v549
        %v566 = vpack.c.b16 %v552, %v551
        %v567 = vpack.c.b16 %v554, %v553
        %v568 = vpack.c.b16 %v556, %v555
        %v569 = vpack.c.b16 %v558, %v557
        %v570 = vpack.c.b16 %v560, %v559
        %v571 = vpack.c.b16 %v562, %v561
        %v572 = vpack.c.b16 %v564, %v563
        %581 = vmatpush.bf16.msra.mxu0 %v572
        %582 = vmatpush.bf16.msra.mxu0 %v571
        %583 = vmatpush.bf16.msra.mxu0 %v570
        %584 = vmatpush.bf16.msra.mxu0 %v569
        %585 = vmatpush.bf16.msra.mxu0 %v568
        %586 = vmatpush.bf16.msra.mxu0 %v567
        %587 = vmatpush.bf16.msra.mxu0 %v566
        %588 = vmatpush.bf16.msra.mxu0 %v565
        %589 = vmatmul.bf16.gmra.mxu0 %v531
        %v590 = vpop.f32.mrf.mxu0
        %v591 = vadd.f32 0.0, %v590
        %v592 = vpop.f32.mrf.mxu0
        %593 = vdwg.mxu0
        %s594 = scalar_lea.vmem [#allocation7], 192
        %v595 = vld [vmem:[%s594] sm:$0xf]
        %v596 = vld [vmem:[%s594 + $0x4] sm:$0xf]
        %v597 = vld [vmem:[%s594 + $0x8] sm:$0xf]
        %v598 = vld [vmem:[%s594 + $0xc] sm:$0xf]
        %v599 = vld [vmem:[%s594 + $0x10] sm:$0xf]
        %v600 = vld [vmem:[%s594 + $0x14] sm:$0xf]
        %v601 = vld [vmem:[%s594 + $0x18] sm:$0xf]
        %v602 = vld [vmem:[%s594 + $0x1c] sm:$0xf]
        %v603 = vld [vmem:[%s594 + $0x20] sm:$0xf]
        %v604 = vld [vmem:[%s594 + $0x24] sm:$0xf]
        %v605 = vld [vmem:[%s594 + $0x28] sm:$0xf]
        %v606 = vld [vmem:[%s594 + $0x2c] sm:$0xf]
        %v607 = vld [vmem:[%s594 + $0x30] sm:$0xf]
        %v608 = vld [vmem:[%s594 + $0x34] sm:$0xf]
        %v609 = vld [vmem:[%s594 + $0x38] sm:$0xf]
        %v610 = vld [vmem:[%s594 + $0x3c] sm:$0xf]
        %v611 = vrot.slane %v355, 3
        %v629 = vunpack.c.l.b16 %v595
        %v630 = vunpack.c.l.b16 %v596
        %v631 = vunpack.c.l.b16 %v597
        %v632 = vunpack.c.l.b16 %v598
        %v633 = vunpack.c.l.b16 %v599
        %v634 = vunpack.c.l.b16 %v600
        %v635 = vunpack.c.l.b16 %v601
        %v636 = vunpack.c.l.b16 %v602
        %v637 = vunpack.c.l.b16 %v603
        %v638 = vunpack.c.l.b16 %v604
        %v639 = vunpack.c.l.b16 %v605
        %v640 = vunpack.c.l.b16 %v606
        %v641 = vunpack.c.l.b16 %v607
        %v642 = vunpack.c.l.b16 %v608
        %v643 = vunpack.c.l.b16 %v609
        %v644 = vunpack.c.l.b16 %v610
        %v645 = vpack.c.b16 %v630, %v629
        %v646 = vpack.c.b16 %v632, %v631
        %v647 = vpack.c.b16 %v634, %v633
        %v648 = vpack.c.b16 %v636, %v635
        %v649 = vpack.c.b16 %v638, %v637
        %v650 = vpack.c.b16 %v640, %v639
        %v651 = vpack.c.b16 %v642, %v641
        %v652 = vpack.c.b16 %v644, %v643
        %661 = vmatpush.bf16.msra.mxu0 %v652
        %662 = vmatpush.bf16.msra.mxu0 %v651
        %663 = vmatpush.bf16.msra.mxu0 %v650
        %664 = vmatpush.bf16.msra.mxu0 %v649
        %665 = vmatpush.bf16.msra.mxu0 %v648
        %666 = vmatpush.bf16.msra.mxu0 %v647
        %667 = vmatpush.bf16.msra.mxu0 %v646
        %668 = vmatpush.bf16.msra.mxu0 %v645
        %669 = vmatmul.bf16.gmra.mxu0 %v611
        %v670 = vpop.f32.mrf.mxu0
        %v671 = vadd.f32 0.0, %v670
        %v672 = vpop.f32.mrf.mxu0
        %673 = vdwg.mxu0
        %v675 = vrot.slane %v511, 6
        %v678 = vrot.slane %v591, 4
        %v681 = vrot.slane %v671, 2
        %vm683 = vcmask 1041408
        %v684 = vsel %vm683, %v430, %v675
        %vm685 = vcmask 1043456
        %v686 = vsel %vm685, %v684, %v678
        %vm687 = vcmask 1045504
        %v688 = vsel %vm687, %v686, %v681
        %v689 = vld [vmem:[#allocation8] sm:$0xff]
        %v690 = vadd.f32 %v688, %v689
        %v691 = vpack.c.bf16 %v337, %v337
        %v692 = vpack.c.bf16 %v690, %v690
        %693 = vxpose.xlu0.c.b16.start [1/8] %v691, 128
        %694 = vxpose.xlu0.c.b16.cont [2/8] 0, 128
        %695 = vxpose.xlu0.c.b16.cont [3/8] 0, 128
        %696 = vxpose.xlu0.c.b16.cont [4/8] 0, 128
        %697 = vxpose.xlu0.c.b16.cont [5/8] 0, 128
        %698 = vxpose.xlu0.c.b16.cont [6/8] 0, 128
        %699 = vxpose.xlu0.c.b16.cont [7/8] 0, 128
        %700 = vxpose.xlu0.c.b16.end [8/8] 0, 128
        %v701 = vpop.trf.xlu0
        %v702 = vpop.trf.xlu0
        %v703 = vpop.trf.xlu0
        %v704 = vpop.trf.xlu0
        %v705 = vpop.trf.xlu0
        %v706 = vpop.trf.xlu0
        %v707 = vpop.trf.xlu0
        %v708 = vpop.trf.xlu0
        %vm709 = vcmask 64512
        %v711 = vsel %vm709, %v701, 0
        %v714 = vsel %vm685, %v692, 0
        %716 = vmatpush.bf16.msra.mxu0 0
        %717 = vmatpush.bf16.msra.mxu0 0
        %718 = vmatpush.bf16.msra.mxu0 0
        %719 = vmatpush.bf16.msra.mxu0 0
        %720 = vmatpush.bf16.msra.mxu0 0
        %721 = vmatpush.bf16.msra.mxu0 0
        %722 = vmatpush.bf16.msra.mxu0 0
        %723 = vmatpush.bf16.msra.mxu0 %v714
        %724 = vmatmul.bf16.gmra.mxu0 %v711
        %v725 = vpop.f32.mrf.mxu0
        %v726 = vadd.f32 0.0, %v725
        %v727 = vpop.f32.mrf.mxu0
        %v728 = vadd.f32 0.0, %v727
        %729 = vdwg.mxu0
        %730 = vst [vmem:[%s263] sm:$0xff] %v726
        %731 = vst [vmem:[%s263 + $0x8] sm:$0xff] %v728
        %s732 = sand.u32 %s120, 1
        %s733 = scalar_lea.sflag [#allocation4], %s732
        %s734 = sand.u32 %s120, 1
        %s735 = smul.addr %s734, 16
        %s736 = scalar_lea.vmem [#allocation10], %s735
        // Predicated region
        $region53: #{tpu_custom_call.1} parent=35 // pred_check
          %p737 = pneg %p130
        $region54: #{tpu_custom_call.1} parent=35 // pred_check_branch
          %739 = sbr.rel (%p737) target = $region56
        $region55: #{tpu_custom_call.1} parent=35 // pred_region
          %741 = vsyncadd %s733, 0
          %s742 = smul.addr %s23, 2
          %s743 = smul.addr %s742, 8
          %s744 = scalar_lea.hbm %s4, %s743
          %s745 = sshll.u32 %s736, 4
          %s746 = int_to_ptr.vmem [resolvable:$true] %s745
          %s747 = sshll.u32 %s744, 4
          %s748 = int_to_ptr.hbm [resolvable:$true] %s747
          %753 = dma.vmem_to_hbm [thread:$0]  %s746, 256, %s748, %s733, 128, 128, 8
        $region56: #{tpu_custom_call.1} parent=35 // pred_fallthru
          _
      $region36: #{tpu_custom_call.1} parent=5 // pred_fallthru
        _
      %p754 = scmp.le.s32.totalorder 2, %s18
      // Predicated region
      $region57: #{tpu_custom_call.1} parent=5 // pred_check
        %p755 = pneg %p754
      $region58: #{tpu_custom_call.1} parent=5 // pred_check_branch
        %757 = sbr.rel (%p755) target = $region60
      $region59: #{tpu_custom_call.1} parent=5 // pred_region
        %s758 = ssub.s32 %s18, 2
        // Predicated region
        $region61: #{tpu_custom_call.1} parent=59 // pred_check
          %p759 = pneg %p136
        $region62: #{tpu_custom_call.1} parent=59 // pred_check_branch
          %761 = sbr.rel (%p759) target = $region64
        $region63: #{tpu_custom_call.1} parent=59 // pred_region
          %s762 = sand.u32 %s121, 1
          %s763 = scalar_lea.sflag [#allocation4], %s762
          %s764 = sand.u32 %s121, 1
          %s765 = smul.addr %s764, 16
          %s766 = scalar_lea.vmem [#allocation10], %s765
          %768 = dma.done %s763, 256
        $region64: #{tpu_custom_call.1} parent=59 // pred_fallthru
          _
      $region60: #{tpu_custom_call.1} parent=5 // pred_fallthru
        _
    $region6: #{tpu_custom_call.1} parent=1 // loop_footer
      %s22 = sadd.s32 1, %s18
    $region7: #{tpu_custom_call.1} parent=1 // loop_footer_branch
      %17 = sbr.rel target = $region3
    $region8: #{tpu_custom_call.1} parent=1 // loop_exit
      _
    %769 = vsyncpa [#allocation3], 1
    %s770 = scalar_lea.sflag [#allocation3], 1
    %771 = vsyncpa %s770, 1
    %772 = vsyncpa [#allocation6], 1
    %773 = vsyncpa [#allocation9], 1
    %774 = vsyncpa [#allocation4], 1
    %s775 = scalar_lea.sflag [#allocation4], 1
    %776 = vsyncpa %s775, 1

</llo_original>
